<compile_context>
chip_gen: v5e
topology: v5e:2x2
jax: 0.10.0
libtpu: 0.0.40
codegen_flags: <defaults>
</compile_context>

<pallas_src>
import functools

import jax
import jax.numpy as jnp
from jax.experimental import pallas as pl
from jax.experimental.pallas import tpu as pltpu


def _round_up(x: int, m: int) -> int:
    return ((x + m - 1) // m) * m


def _projection_kernel(x_ref, w_ref, o_ref):
    # Single-tile matmul on the MXU, accumulate in f32.
    o_ref[...] = jnp.dot(
        x_ref[...], w_ref[...], preferred_element_type=jnp.float32
    ).astype(o_ref.dtype)


def _pick_tiles(m: int, k: int, n: int, itemsize: int):
    """Pick (tm, tn) so the double-buffered working set fits scoped VMEM."""
    sub = 8 if itemsize >= 4 else 16           # sublane alignment
    tn = min(_round_up(n, 128), 512)           # lane-dense output tiles
    tm = min(_round_up(m, sub), 1024)          # big row tiles amortize small K

    def vmem_bytes(tm_, tn_):
        # 2x-buffered x tile + 2x-buffered W tile + 2x-buffered out tile.
        return itemsize * (2 * tm_ * k + 2 * k * tn_ + 2 * tm_ * tn_)

    # Conservative budget that works on v5e (16 MiB default raised), v6e and
    # v7x (64 MiB physical) without re-tuning per generation.
    budget = 20 * 1024 * 1024
    while tm > sub and vmem_bytes(tm, tn) > budget:
        tm = max(sub, _round_up(tm // 2, sub))
    return tm, tn


@functools.partial(jax.jit, static_argnames=("interpret",))
def random_projection(x, projection_matrix, interpret=False):
    """Computes x @ projection_matrix with a tiled Pallas TPU kernel.

    x:                  (..., in_channels)
    projection_matrix:  (in_channels, out_channels)
    returns:            (..., out_channels)
    """
    in_channels, out_channels = projection_matrix.shape
    assert x.shape[-1] == in_channels

    leading = x.shape[:-1]
    m = 1
    for d in leading:
        m *= d

    dtype = x.dtype
    itemsize = jnp.dtype(dtype).itemsize
    k = in_channels

    x2d = x.reshape(m, k)
    # Keep dtypes consistent so jnp.dot does not promote inside the kernel.
    w = projection_matrix.astype(dtype)

    tm, tn = _pick_tiles(m, k, out_channels, itemsize)
    m_pad = _round_up(m, tm)
    n_pad = _round_up(out_channels, tn)

    if m_pad != m:
        x2d = jnp.pad(x2d, ((0, m_pad - m), (0, 0)))
    if n_pad != out_channels:
        w = jnp.pad(w, ((0, 0), (0, n_pad - out_channels)))

    grid_m = m_pad // tm
    grid_n = n_pad // tn

    flops = 2 * m_pad * k * n_pad
    bytes_accessed = itemsize * (m_pad * k + k * n_pad + m_pad * n_pad)

    out = pl.pallas_call(
        _projection_kernel,
        out_shape=jax.ShapeDtypeStruct((m_pad, n_pad), dtype),
        # M is the innermost grid axis: the W tile's block index is constant
        # across it, so the weight stays resident in VMEM while x streams.
        grid=(grid_n, grid_m),
        in_specs=[
            pl.BlockSpec((tm, k), lambda j, i: (i, 0)),   # x row tiles
            pl.BlockSpec((k, tn), lambda j, i: (0, j)),   # W column tile (resident)
        ],
        out_specs=pl.BlockSpec((tm, tn), lambda j, i: (i, j)),
        compiler_params=pltpu.CompilerParams(
            dimension_semantics=("parallel", "parallel"),
            vmem_limit_bytes=32 * 1024 * 1024,
        ),
        cost_estimate=pl.CostEstimate(
            flops=flops, transcendentals=0, bytes_accessed=bytes_accessed
        ),
        interpret=interpret,
    )(x2d, w)

    out = out[:m, :out_channels]
    return out.reshape(*leading, out_channels)


class RandomProjection:
    """JAX/Pallas counterpart of the PyTorch RandomProjection module."""

    def __init__(self, in_channels: int, out_channels: int, norm=None, *, key=None):
        self.in_channels = in_channels
        self.out_channels = out_channels
        self.norm = norm  # optional callable applied post-projection (plain JAX)
        if key is None:
            key = jax.random.PRNGKey(0)
        # torch: torch.zeros(in, out).uniform_(-1, 1)
        self.projection_matrix = jax.random.uniform(
            key, (in_channels, out_channels), dtype=jnp.float32,
            minval=-1.0, maxval=1.0,
        )

    def __call__(self, x):
        result = random_projection(x, self.projection_matrix)
        if self.norm is not None:
            # TODO(synk): norm is a caller-supplied callable; applied outside the kernel.
            result = self.norm(result)
        return result


if __name__ == "__main__":
    key = jax.random.PRNGKey(0)
    k_x, k_w, k_x2 = jax.random.split(key, 3)

    batch, seq, in_channels, out_channels = 2, 8, 32, 64
    x = jax.random.normal(k_x, (batch, seq, in_channels), dtype=jnp.float32)

    module = RandomProjection(in_channels, out_channels, norm=None, key=k_w)
    y = module(x)
    y = jax.block_until_ready(y)

    # Sanity check against plain-JAX reference.
    y_ref = x @ module.projection_matrix
    assert y.shape == (batch, seq, out_channels)
    assert jnp.allclose(y, y_ref, atol=1e-5, rtol=1e-5)

    # Second check: leading dims whose flat size is not a multiple of 8
    # (exercises the wrapper-side M/N padding + slicing path).
    x2 = jax.random.normal(k_x2, (3, 5, in_channels), dtype=jnp.float32)
    y2 = jax.block_until_ready(module(x2))
    y2_ref = x2 @ module.projection_matrix
    assert y2.shape == (3, 5, out_channels)
    assert jnp.allclose(y2, y2_ref, atol=1e-5, rtol=1e-5)

    print("KERNEL_OK")
</pallas_src>

<mosaic_0001>
module attributes {stable_mosaic.version = 11 : i64} {
  func.func @_projection_kernel(%arg0: i32, %arg1: i32, %arg2: memref<16x32xf32, #tpu.memory_space<vmem>>, %arg3: memref<32x128xf32, #tpu.memory_space<vmem>>, %arg4: memref<16x128xf32, #tpu.memory_space<vmem>>) attributes {dimension_semantics = [#tpu.dimension_semantics<parallel>, #tpu.dimension_semantics<parallel>], iteration_bounds = array<i64: 1, 1>, scalar_prefetch = 0 : i64, scratch_operands = 0 : i64, tpu.core_type = #tpu.core_type<tc>, window_params = [{transform_indices = @transform_0, window_bounds = array<i64: 16, 32>}, {transform_indices = @transform_1, window_bounds = array<i64: 32, 128>}, {transform_indices = @transform_2, window_bounds = array<i64: 16, 128>}]} {
    %c0 = arith.constant 0 : index
    %c0_0 = arith.constant 0 : index
    %0 = vector.load %arg2[%c0, %c0_0] : memref<16x32xf32, #tpu.memory_space<vmem>>, vector<16x32xf32>
    %c0_1 = arith.constant 0 : index
    %c0_2 = arith.constant 0 : index
    %1 = vector.load %arg3[%c0_1, %c0_2] : memref<32x128xf32, #tpu.memory_space<vmem>>, vector<32x128xf32>
    %cst = arith.constant dense<0.000000e+00> : vector<16x128xf32>
    %2 = tpu.matmul %0, %1, %cst {dimension_numbers = #tpu.dot_dimension_numbers<[1], [0], [0], [1], [0, 0, 1, 1], [], []>} : vector<16x32xf32>, vector<32x128xf32>, vector<16x128xf32> -> vector<16x128xf32>
    %c0_3 = arith.constant 0 : index
    %c0_4 = arith.constant 0 : index
    %3 = vector.load %arg4[%c0_3, %c0_4] : memref<16x128xf32, #tpu.memory_space<vmem>>, vector<16x128xf32>
    tpu.vector_store %arg4[%c0_3, %c0_4], %2 {strides = array<i32>} : memref<16x128xf32, #tpu.memory_space<vmem>>, vector<16x128xf32>,
    return
  }
  func.func @transform_0(%arg0: i32, %arg1: i32) -> (i32, i32) {
    %c0_i32 = arith.constant 0 : i32
    %c0_i32_0 = arith.constant 0 : i32
    return %arg1, %c0_i32 : i32, i32
  }
  func.func @transform_1(%arg0: i32, %arg1: i32) -> (i32, i32) {
    %c0_i32 = arith.constant 0 : i32
    %c0_i32_0 = arith.constant 0 : i32
    return %c0_i32, %arg0 : i32, i32
  }
  func.func @transform_2(%arg0: i32, %arg1: i32) -> (i32, i32) {
    %c0_i32 = arith.constant 0 : i32
    return %arg1, %arg0 : i32, i32
  }
}

</mosaic_0001>

<llo_original>
// kernel: random_projection.1
$region0: #{random_projection.1}
  #allocation0 [shape = 'u32[]', space=smem, size = 0x4, offset = 0x4, fixed_abs, tag = 'smem constant byte address 0x4 - core index']
  #allocation1 [shape = 'u32[72,128]{1,0:T(1,128)}', space=vmem, size = 0x9000, scoped, tag = 'internal scratch']
  %s0 = inlined_call_operand.vmem [shape: f32[16,32], index: 0, kind: input, shape index: {}]
  %s1 = inlined_call_operand.vmem [shape: f32[32,128], index: 1, kind: input, shape index: {}]
  %s2 = inlined_call_operand.vmem [shape: f32[16,128], index: 2, kind: output, shape index: {}]
  %s3 = sld [smem:[#allocation0]]
  $region18: #{random_projection.1} parent=0
    _
  %s5 = ssub.s32 1, %s3
  %s6 = scalar_select 0, %s5, %s3
  // Predicated region
  $region2: #{random_projection.1} parent=0 // pred_check
    _
  $region3: #{random_projection.1} parent=0 // pred_check_branch
    %8 = sbr.rel (0) target = $region5
  $region4: #{random_projection.1} parent=0 // pred_region
    _
  $region5: #{random_projection.1} parent=0 // pred_fallthru
    _
  // Predicated region
  $region6: #{random_projection.1} parent=0 // pred_check
    _
  $region7: #{random_projection.1} parent=0 // pred_check_branch
    %10 = sbr.rel (0) target = $region9
  $region8: #{random_projection.1} parent=0 // pred_region
    _
  $region9: #{random_projection.1} parent=0 // pred_fallthru
    _
  %v11 = vld [vmem:[%s0] sm:$0xff]
  %v12 = vld [vmem:[%s0 + $0x8] sm:$0xff]
  %v13 = vld [vmem:[%s1] sm:$0xff]
  %v14 = vld [vmem:[%s1 + $0x8] sm:$0xff]
  %v15 = vld [vmem:[%s1 + $0x10] sm:$0xff]
  %v16 = vld [vmem:[%s1 + $0x18] sm:$0xff]
  %vm17 = vcmask 261120
  %v19 = vsel %vm17, %v11, 0
  %v22 = vsel %vm17, %v12, 0
  %24 = vmatpush.msra.mxu0 0.0
  %25 = vmatpush.msra.mxu0 0.0
  %26 = vmatpush.msra.mxu0 0.0
  %27 = vmatpush.msra.mxu0 0.0
  %28 = vmatpush.msra.mxu0 0.0
  %29 = vmatpush.msra.mxu0 0.0
  %30 = vmatpush.msra.mxu0 0.0
  %31 = vmatpush.msra.mxu0 0.0
  %32 = vmatpush.msra.mxu0 0.0
  %33 = vmatpush.msra.mxu0 0.0
  %34 = vmatpush.msra.mxu0 0.0
  %35 = vmatpush.msra.mxu0 0.0
  %36 = vmatpush.msra.mxu0 %v16
  %37 = vmatpush.msra.mxu0 %v15
  %38 = vmatpush.msra.mxu0 %v14
  %39 = vmatpush.msra.mxu0 %v13
  %40 = vmatmul.f32.gmra.mxu0 %v19
  %v41 = vpop.f32.mrf.mxu0
  %v42 = vadd.f32 0.0, %v41
  %43 = vmatmul.f32.gmra.mxu0 %v22
  %v44 = vpop.f32.mrf.mxu0
  %v45 = vadd.f32 0.0, %v44
  %46 = vdwg.mxu0
  %47 = vst [vmem:[%s2] sm:$0xff] %v42
  %48 = vst [vmem:[%s2 + $0x8] sm:$0xff] %v45
  // Predicated region
  $region10: #{random_projection.1} parent=0 // pred_check
    _
  $region11: #{random_projection.1} parent=0 // pred_check_branch
    %50 = sbr.rel (0) target = $region13
  $region12: #{random_projection.1} parent=0 // pred_region
    _
  $region13: #{random_projection.1} parent=0 // pred_fallthru
    _
  // Predicated region
  $region14: #{random_projection.1} parent=0 // pred_check
    _
  $region15: #{random_projection.1} parent=0 // pred_check_branch
    %52 = sbr.rel (0) target = $region17
  $region16: #{random_projection.1} parent=0 // pred_region
    _
  $region17: #{random_projection.1} parent=0 // pred_fallthru
    _

</llo_original>
